<compile_context>
chip_gen: v7x
topology: tpu7x:2x2x1
jax: 0.10.0
libtpu: 0.0.40
codegen_flags: <defaults>
</compile_context>

<pallas_src>
import jax
import jax.numpy as jnp
from jax.experimental import pallas as pl
from jax.experimental.pallas import tpu as pltpu

HIDDEN = 10        # nn.Linear(1, 10)
LANES = 512        # lane width of the 2D batch slab (multiple of 128)
BLOCK_ROWS = 512   # sublane rows per grid step -> 512x512 f32 = 1 MiB / tile


def mlp_kernel(params_ref, x_ref, o_ref):
    """out = sum_j w2[j] * tanh(w1[j] * x + b1[j]) + b2  (elementwise on the slab).

    params_ref : SMEM (31,) f32 = [w1(10) | b1(10) | w2(10) | b2(1)]
    x_ref      : VMEM (block_rows, LANES)  batch slab (batch on sublanes+lanes)
    o_ref      : VMEM (block_rows, LANES)
    """
    x = x_ref[...]
    acc = jnp.zeros_like(x)
    for j in range(HIDDEN):               # unrolled: scalar-operand FMAs + EUP tanh
        w1j = params_ref[j]
        b1j = params_ref[HIDDEN + j]
        w2j = params_ref[2 * HIDDEN + j]
        acc = acc + w2j * jnp.tanh(w1j * x + b1j)
    o_ref[...] = (acc + params_ref[3 * HIDDEN]).astype(o_ref.dtype)


def _pack_params(hidden_w, hidden_b, predict_w, predict_b):
    return jnp.concatenate([
        hidden_w.reshape(-1).astype(jnp.float32),
        hidden_b.reshape(-1).astype(jnp.float32),
        predict_w.reshape(-1).astype(jnp.float32),
        predict_b.reshape(-1).astype(jnp.float32),
    ])


def net_reference(x, hidden_w, hidden_b, predict_w, predict_b):
    """Plain-JAX forward, identical math to the PyTorch module."""
    h = jnp.tanh(x @ hidden_w.T + hidden_b[None, :])
    return h @ predict_w.T + predict_b[None, :]


def net_forward(x, hidden_w, hidden_b, predict_w, predict_b,
                *, block_rows=BLOCK_ROWS, lanes=LANES, min_kernel_batch=32768):
    """Forward pass of Net.

    x         : (B, 1) float32 (same as the PyTorch module's input)
    hidden_w  : (10, 1)  hidden.weight
    hidden_b  : (10,)    hidden.bias
    predict_w : (1, 10)  predict.weight
    predict_b : (1,)     predict.bias
    returns (B, 1)
    """
    B = x.shape[0]

    # Small-batch fast path: let XLA fuse the tiny expression.
    if B < min_kernel_batch:
        return net_reference(x, hidden_w, hidden_b, predict_w, predict_b)

    params = _pack_params(hidden_w, hidden_b, predict_w, predict_b)   # (31,)

    # Batch on sublanes *and* lanes: flat (B,) -> dense (rows, lanes) slab.
    rows = pl.cdiv(B, lanes)
    padded = rows * lanes
    xf = x.reshape(B)
    if padded != B:
        # Only pad up to the next lane-width multiple (< `lanes` elements),
        # never to a multiple of the full block size.
        xf = jnp.pad(xf, (0, padded - B))
    x2d = xf.reshape(rows, lanes)

    # Block rows: multiple of 8 sublanes, or the full (small) row count.
    tr = min(block_rows, rows)
    if tr != rows:
        tr = max(8, (tr // 8) * 8)
    grid = (pl.cdiv(rows, tr),)          # ragged last block -> masked edge store

    out2d = pl.pallas_call(
        mlp_kernel,
        out_shape=jax.ShapeDtypeStruct((rows, lanes), x.dtype),
        grid=grid,
        in_specs=[
            pl.BlockSpec(memory_space=pltpu.MemorySpace.SMEM),   # 31 scalars, SMEM
            pl.BlockSpec((tr, lanes), lambda i: (i, 0)),         # x slab tile
        ],
        out_specs=pl.BlockSpec((tr, lanes), lambda i: (i, 0)),   # lane-dense out
        compiler_params=pltpu.CompilerParams(
            dimension_semantics=("parallel",),   # v7x: shard batch over both TCs
        ),
    )(params, x2d)

    return out2d.reshape(padded, 1)[:B]


def init_params(key):
    """PyTorch nn.Linear default init: U(-1/sqrt(fan_in), +1/sqrt(fan_in))."""
    k1, k2, k3, k4 = jax.random.split(key, 4)
    bound1 = 1.0                                  # hidden: fan_in = 1
    hidden_w = jax.random.uniform(k1, (HIDDEN, 1), jnp.float32, -bound1, bound1)
    hidden_b = jax.random.uniform(k2, (HIDDEN,), jnp.float32, -bound1, bound1)
    bound2 = 1.0 / jnp.sqrt(float(HIDDEN))        # predict: fan_in = 10
    predict_w = jax.random.uniform(k3, (1, HIDDEN), jnp.float32, -bound2, bound2)
    predict_b = jax.random.uniform(k4, (1,), jnp.float32, -bound2, bound2)
    return hidden_w, hidden_b, predict_w, predict_b


if __name__ == "__main__":
    key = jax.random.PRNGKey(0)
    k_x, k_p = jax.random.split(key)
    hidden_w, hidden_b, predict_w, predict_b = init_params(k_p)

    # Exercise the Pallas kernel path (min_kernel_batch=0 forces it at a small,
    # test-friendly batch; 1000 is not a multiple of the 512-lane slab width,
    # so the tail pad + ragged-grid masked store are covered too).
    batch = 1000
    x = jax.random.normal(k_x, (batch, 1), jnp.float32)
    out = net_forward(x, hidden_w, hidden_b, predict_w, predict_b,
                      min_kernel_batch=0)
    out = jax.block_until_ready(out)
    ref = net_reference(x, hidden_w, hidden_b, predict_w, predict_b)
    assert out.shape == (batch, 1)
    assert jnp.allclose(out, ref, atol=1e-5, rtol=1e-5)

    # Small-batch fast path (pure XLA, no kernel launch).
    x_small = jax.random.normal(k_x, (8, 1), jnp.float32)
    out_small = net_forward(x_small, hidden_w, hidden_b, predict_w, predict_b)
    out_small = jax.block_until_ready(out_small)
    ref_small = net_reference(x_small, hidden_w, hidden_b, predict_w, predict_b)
    assert jnp.allclose(out_small, ref_small, atol=1e-5, rtol=1e-5)

    print("KERNEL_OK")
</pallas_src>

<mosaic_0001>
module attributes {stable_mosaic.version = 11 : i64} {
  func.func @mlp_kernel(%arg0: i32, %arg1: memref<31xf32, #tpu.memory_space<smem>>, %arg2: memref<2x512xf32, #tpu.memory_space<vmem>>, %arg3: memref<2x512xf32, #tpu.memory_space<vmem>>) attributes {dimension_semantics = [#tpu.dimension_semantics<parallel>], iteration_bounds = array<i64: 1>, scalar_prefetch = 0 : i64, scratch_operands = 0 : i64, tpu.core_type = #tpu.core_type<tc>, window_params = [{transform_indices = @transform_0, window_bounds = array<i64: 31>}, {transform_indices = @transform_1, window_bounds = array<i64: 2, 512>}, {transform_indices = @transform_2, window_bounds = array<i64: 2, 512>}]} {
    %c0 = arith.constant 0 : index
    %c0_0 = arith.constant 0 : index
    %0 = vector.load %arg2[%c0, %c0_0] : memref<2x512xf32, #tpu.memory_space<vmem>>, vector<2x512xf32>
    %cst = arith.constant 0.000000e+00 : f32
    %1 = vector.broadcast %cst : f32 to vector<2x512xf32>
    %c0_1 = arith.constant 0 : index
    %2 = memref.load %arg1[%c0_1] : memref<31xf32, #tpu.memory_space<smem>>
    %c10 = arith.constant 10 : index
    %3 = memref.load %arg1[%c10] : memref<31xf32, #tpu.memory_space<smem>>
    %c20 = arith.constant 20 : index
    %4 = memref.load %arg1[%c20] : memref<31xf32, #tpu.memory_space<smem>>
    %5 = vector.broadcast %2 : f32 to vector<2x512xf32>
    %6 = arith.mulf %5, %0 : vector<2x512xf32>
    %7 = vector.broadcast %3 : f32 to vector<2x512xf32>
    %8 = arith.addf %6, %7 : vector<2x512xf32>
    %9 = math.tanh %8 : vector<2x512xf32>
    %10 = vector.broadcast %4 : f32 to vector<2x512xf32>
    %11 = arith.mulf %10, %9 : vector<2x512xf32>
    %12 = arith.addf %1, %11 : vector<2x512xf32>
    %c1 = arith.constant 1 : index
    %13 = memref.load %arg1[%c1] : memref<31xf32, #tpu.memory_space<smem>>
    %c11 = arith.constant 11 : index
    %14 = memref.load %arg1[%c11] : memref<31xf32, #tpu.memory_space<smem>>
    %c21 = arith.constant 21 : index
    %15 = memref.load %arg1[%c21] : memref<31xf32, #tpu.memory_space<smem>>
    %16 = vector.broadcast %13 : f32 to vector<2x512xf32>
    %17 = arith.mulf %16, %0 : vector<2x512xf32>
    %18 = vector.broadcast %14 : f32 to vector<2x512xf32>
    %19 = arith.addf %17, %18 : vector<2x512xf32>
    %20 = math.tanh %19 : vector<2x512xf32>
    %21 = vector.broadcast %15 : f32 to vector<2x512xf32>
    %22 = arith.mulf %21, %20 : vector<2x512xf32>
    %23 = arith.addf %12, %22 : vector<2x512xf32>
    %c2 = arith.constant 2 : index
    %24 = memref.load %arg1[%c2] : memref<31xf32, #tpu.memory_space<smem>>
    %c12 = arith.constant 12 : index
    %25 = memref.load %arg1[%c12] : memref<31xf32, #tpu.memory_space<smem>>
    %c22 = arith.constant 22 : index
    %26 = memref.load %arg1[%c22] : memref<31xf32, #tpu.memory_space<smem>>
    %27 = vector.broadcast %24 : f32 to vector<2x512xf32>
    %28 = arith.mulf %27, %0 : vector<2x512xf32>
    %29 = vector.broadcast %25 : f32 to vector<2x512xf32>
    %30 = arith.addf %28, %29 : vector<2x512xf32>
    %31 = math.tanh %30 : vector<2x512xf32>
    %32 = vector.broadcast %26 : f32 to vector<2x512xf32>
    %33 = arith.mulf %32, %31 : vector<2x512xf32>
    %34 = arith.addf %23, %33 : vector<2x512xf32>
    %c3 = arith.constant 3 : index
    %35 = memref.load %arg1[%c3] : memref<31xf32, #tpu.memory_space<smem>>
    %c13 = arith.constant 13 : index
    %36 = memref.load %arg1[%c13] : memref<31xf32, #tpu.memory_space<smem>>
    %c23 = arith.constant 23 : index
    %37 = memref.load %arg1[%c23] : memref<31xf32, #tpu.memory_space<smem>>
    %38 = vector.broadcast %35 : f32 to vector<2x512xf32>
    %39 = arith.mulf %38, %0 : vector<2x512xf32>
    %40 = vector.broadcast %36 : f32 to vector<2x512xf32>
    %41 = arith.addf %39, %40 : vector<2x512xf32>
    %42 = math.tanh %41 : vector<2x512xf32>
    %43 = vector.broadcast %37 : f32 to vector<2x512xf32>
    %44 = arith.mulf %43, %42 : vector<2x512xf32>
    %45 = arith.addf %34, %44 : vector<2x512xf32>
    %c4 = arith.constant 4 : index
    %46 = memref.load %arg1[%c4] : memref<31xf32, #tpu.memory_space<smem>>
    %c14 = arith.constant 14 : index
    %47 = memref.load %arg1[%c14] : memref<31xf32, #tpu.memory_space<smem>>
    %c24 = arith.constant 24 : index
    %48 = memref.load %arg1[%c24] : memref<31xf32, #tpu.memory_space<smem>>
    %49 = vector.broadcast %46 : f32 to vector<2x512xf32>
    %50 = arith.mulf %49, %0 : vector<2x512xf32>
    %51 = vector.broadcast %47 : f32 to vector<2x512xf32>
    %52 = arith.addf %50, %51 : vector<2x512xf32>
    %53 = math.tanh %52 : vector<2x512xf32>
    %54 = vector.broadcast %48 : f32 to vector<2x512xf32>
    %55 = arith.mulf %54, %53 : vector<2x512xf32>
    %56 = arith.addf %45, %55 : vector<2x512xf32>
    %c5 = arith.constant 5 : index
    %57 = memref.load %arg1[%c5] : memref<31xf32, #tpu.memory_space<smem>>
    %c15 = arith.constant 15 : index
    %58 = memref.load %arg1[%c15] : memref<31xf32, #tpu.memory_space<smem>>
    %c25 = arith.constant 25 : index
    %59 = memref.load %arg1[%c25] : memref<31xf32, #tpu.memory_space<smem>>
    %60 = vector.broadcast %57 : f32 to vector<2x512xf32>
    %61 = arith.mulf %60, %0 : vector<2x512xf32>
    %62 = vector.broadcast %58 : f32 to vector<2x512xf32>
    %63 = arith.addf %61, %62 : vector<2x512xf32>
    %64 = math.tanh %63 : vector<2x512xf32>
    %65 = vector.broadcast %59 : f32 to vector<2x512xf32>
    %66 = arith.mulf %65, %64 : vector<2x512xf32>
    %67 = arith.addf %56, %66 : vector<2x512xf32>
    %c6 = arith.constant 6 : index
    %68 = memref.load %arg1[%c6] : memref<31xf32, #tpu.memory_space<smem>>
    %c16 = arith.constant 16 : index
    %69 = memref.load %arg1[%c16] : memref<31xf32, #tpu.memory_space<smem>>
    %c26 = arith.constant 26 : index
    %70 = memref.load %arg1[%c26] : memref<31xf32, #tpu.memory_space<smem>>
    %71 = vector.broadcast %68 : f32 to vector<2x512xf32>
    %72 = arith.mulf %71, %0 : vector<2x512xf32>
    %73 = vector.broadcast %69 : f32 to vector<2x512xf32>
    %74 = arith.addf %72, %73 : vector<2x512xf32>
    %75 = math.tanh %74 : vector<2x512xf32>
    %76 = vector.broadcast %70 : f32 to vector<2x512xf32>
    %77 = arith.mulf %76, %75 : vector<2x512xf32>
    %78 = arith.addf %67, %77 : vector<2x512xf32>
    %c7 = arith.constant 7 : index
    %79 = memref.load %arg1[%c7] : memref<31xf32, #tpu.memory_space<smem>>
    %c17 = arith.constant 17 : index
    %80 = memref.load %arg1[%c17] : memref<31xf32, #tpu.memory_space<smem>>
    %c27 = arith.constant 27 : index
    %81 = memref.load %arg1[%c27] : memref<31xf32, #tpu.memory_space<smem>>
    %82 = vector.broadcast %79 : f32 to vector<2x512xf32>
    %83 = arith.mulf %82, %0 : vector<2x512xf32>
    %84 = vector.broadcast %80 : f32 to vector<2x512xf32>
    %85 = arith.addf %83, %84 : vector<2x512xf32>
    %86 = math.tanh %85 : vector<2x512xf32>
    %87 = vector.broadcast %81 : f32 to vector<2x512xf32>
    %88 = arith.mulf %87, %86 : vector<2x512xf32>
    %89 = arith.addf %78, %88 : vector<2x512xf32>
    %c8 = arith.constant 8 : index
    %90 = memref.load %arg1[%c8] : memref<31xf32, #tpu.memory_space<smem>>
    %c18 = arith.constant 18 : index
    %91 = memref.load %arg1[%c18] : memref<31xf32, #tpu.memory_space<smem>>
    %c28 = arith.constant 28 : index
    %92 = memref.load %arg1[%c28] : memref<31xf32, #tpu.memory_space<smem>>
    %93 = vector.broadcast %90 : f32 to vector<2x512xf32>
    %94 = arith.mulf %93, %0 : vector<2x512xf32>
    %95 = vector.broadcast %91 : f32 to vector<2x512xf32>
    %96 = arith.addf %94, %95 : vector<2x512xf32>
    %97 = math.tanh %96 : vector<2x512xf32>
    %98 = vector.broadcast %92 : f32 to vector<2x512xf32>
    %99 = arith.mulf %98, %97 : vector<2x512xf32>
    %100 = arith.addf %89, %99 : vector<2x512xf32>
    %c9 = arith.constant 9 : index
    %101 = memref.load %arg1[%c9] : memref<31xf32, #tpu.memory_space<smem>>
    %c19 = arith.constant 19 : index
    %102 = memref.load %arg1[%c19] : memref<31xf32, #tpu.memory_space<smem>>
    %c29 = arith.constant 29 : index
    %103 = memref.load %arg1[%c29] : memref<31xf32, #tpu.memory_space<smem>>
    %104 = vector.broadcast %101 : f32 to vector<2x512xf32>
    %105 = arith.mulf %104, %0 : vector<2x512xf32>
    %106 = vector.broadcast %102 : f32 to vector<2x512xf32>
    %107 = arith.addf %105, %106 : vector<2x512xf32>
    %108 = math.tanh %107 : vector<2x512xf32>
    %109 = vector.broadcast %103 : f32 to vector<2x512xf32>
    %110 = arith.mulf %109, %108 : vector<2x512xf32>
    %111 = arith.addf %100, %110 : vector<2x512xf32>
    %c30 = arith.constant 30 : index
    %112 = memref.load %arg1[%c30] : memref<31xf32, #tpu.memory_space<smem>>
    %113 = vector.broadcast %112 : f32 to vector<2x512xf32>
    %114 = arith.addf %111, %113 : vector<2x512xf32>
    %c0_2 = arith.constant 0 : index
    %c0_3 = arith.constant 0 : index
    %115 = vector.load %arg3[%c0_2, %c0_3] : memref<2x512xf32, #tpu.memory_space<vmem>>, vector<2x512xf32>
    tpu.vector_store %arg3[%c0_2, %c0_3], %114 {strides = array<i32>} : memref<2x512xf32, #tpu.memory_space<vmem>>, vector<2x512xf32>,
    return
  }
  func.func @transform_0(%arg0: i32) -> i32 {
    %c0_i32 = arith.constant 0 : i32
    %c0_i32_0 = arith.constant 0 : i32
    return %c0_i32 : i32
  }
  func.func @transform_1(%arg0: i32) -> (i32, i32) {
    %c0_i32 = arith.constant 0 : i32
    %c0_i32_0 = arith.constant 0 : i32
    return %arg0, %c0_i32 : i32, i32
  }
  func.func @transform_2(%arg0: i32) -> (i32, i32) {
    %c0_i32 = arith.constant 0 : i32
    %c0_i32_0 = arith.constant 0 : i32
    return %arg0, %c0_i32 : i32, i32
  }
}

</mosaic_0001>

<llo_original>
// kernel: tpu_custom_call.1
$region0: #{tpu_custom_call.1}
  #allocation0 [shape = 'u32[]', space=smem, size = 0x4, offset = 0x4, fixed_abs, tag = 'smem constant byte address 0x4 - core index']
  #allocation1 [shape = 'u32[144,128]{1,0:T(1,128)}', space=vmem, size = 0x12000, scoped, tag = 'internal scratch']
  %s0 = inlined_call_operand.hbm [shape: f32[31], index: 0, kind: input, shape index: {}]
  %s1 = inlined_call_operand.hbm [shape: f32[2,512], index: 1, kind: input, shape index: {}]
  %s2 = inlined_call_operand.hbm [shape: f32[2,512], index: 2, kind: output, shape index: {}]
  %s3 = sld [smem:[#allocation0]]
  $region26: #{tpu_custom_call.1} parent=0
    _
  %s5 = ssub.s32 1, %s3
  %s6 = scalar_select 0, %s5, %s3
  $region1: #{tpu_custom_call.1} parent=0
    #allocation2 [shape = 'u8[512]{0}', space=smem, size = 0x200, scoped, tag = 'input window, operand 0, single buffered']
    #allocation3 [shape = 's32[1]{0}', space=sflag, size = 0x4, scoped, tag = 'scoped memory for tpu_custom_call.1']
    #allocation4 [shape = 's32[1]{0}', space=sflag, size = 0x4, scoped, tag = 'scoped memory for tpu_custom_call.1']
    #allocation5 [shape = 's32[1]{0}', space=sflag, size = 0x4, scoped, tag = 'scoped memory for tpu_custom_call.1']
    #allocation6 [shape = 'u8[4096]{0}', space=vmem, size = 0x1000, scoped, tag = 'input window, operand 1, single buffered']
    #allocation7 [shape = 'u8[4096]{0}', space=vmem, size = 0x1000, scoped, tag = 'output window, operand 0, single buffered']
    %7 = vsyncpa [#allocation5], 0
    %8 = vsyncpa [#allocation3], 0
    %9 = vsyncpa [#allocation4], 0
    // Predicated region
    $region2: #{tpu_custom_call.1} parent=1 // pred_check
      _
    $region3: #{tpu_custom_call.1} parent=1 // pred_check_branch
      %11 = sbr.rel (0) target = $region5
    $region4: #{tpu_custom_call.1} parent=1 // pred_region
      %s13 = ssub.s32 16, 16
      %14 = vsyncadd [#allocation5], %s13
      %17 = dma.hbm_to_smem %s0, 16, [#allocation2], [#allocation5]
    $region5: #{tpu_custom_call.1} parent=1 // pred_fallthru
      _
    // Predicated region
    $region6: #{tpu_custom_call.1} parent=1 // pred_check
      _
    $region7: #{tpu_custom_call.1} parent=1 // pred_check_branch
      %19 = sbr.rel (0) target = $region9
    $region8: #{tpu_custom_call.1} parent=1 // pred_region
      %s21 = ssub.s32 128, 128
      %22 = vsyncadd [#allocation3], %s21
      %s24 = sshll.u32 [#allocation6], 4
      %s25 = int_to_ptr.vmem [resolvable:$true] %s24
      %27 = dma.hbm_to_vmem [thread:$0]  %s1, 128, %s25, [#allocation3]
    $region9: #{tpu_custom_call.1} parent=1 // pred_fallthru
      _
    // Predicated region
    $region10: #{tpu_custom_call.1} parent=1 // pred_check
      _
    $region11: #{tpu_custom_call.1} parent=1 // pred_check_branch
      %29 = sbr.rel (0) target = $region13
    $region12: #{tpu_custom_call.1} parent=1 // pred_region
      %30 = dma.done [#allocation5], 16
    $region13: #{tpu_custom_call.1} parent=1 // pred_fallthru
      _
    // Predicated region
    $region14: #{tpu_custom_call.1} parent=1 // pred_check
      _
    $region15: #{tpu_custom_call.1} parent=1 // pred_check_branch
      %32 = sbr.rel (0) target = $region17
    $region16: #{tpu_custom_call.1} parent=1 // pred_region
      %33 = dma.done [#allocation3], 128
    $region17: #{tpu_custom_call.1} parent=1 // pred_fallthru
      _
    %34 = sfence
    %v35 = vld [vmem:[#allocation6] sm:$0xff]
    %s36 = sld [smem:[#allocation2]]
    %s37 = sld [smem:[#allocation2 + $0xa]]
    %s38 = sld [smem:[#allocation2 + $0x14]]
    %v39 = vstv %s36
    %v40 = vmul.f32 %v39, %v35
    %v41 = vstv %s37
    %v42 = vadd.f32 %v40, %v41
    %v43 = vtanh.pop %v42
    %v44 = vstv %s38
    %v45 = vmul.f32 %v44, %v43
    %v46 = vadd.f32 %v45, 0.0
    %s47 = sld [smem:[#allocation2 + $0x1]]
    %s48 = sld [smem:[#allocation2 + $0xb]]
    %s49 = sld [smem:[#allocation2 + $0x15]]
    %v50 = vstv %s47
    %v51 = vmul.f32 %v50, %v35
    %v52 = vstv %s48
    %v53 = vadd.f32 %v51, %v52
    %v54 = vtanh.pop %v53
    %v55 = vstv %s49
    %v56 = vmul.f32 %v55, %v54
    %v57 = vadd.f32 %v46, %v56
    %s58 = sld [smem:[#allocation2 + $0x2]]
    %s59 = sld [smem:[#allocation2 + $0xc]]
    %s60 = sld [smem:[#allocation2 + $0x16]]
    %v61 = vstv %s58
    %v62 = vmul.f32 %v61, %v35
    %v63 = vstv %s59
    %v64 = vadd.f32 %v62, %v63
    %v65 = vtanh.pop %v64
    %v66 = vstv %s60
    %v67 = vmul.f32 %v66, %v65
    %v68 = vadd.f32 %v57, %v67
    %s69 = sld [smem:[#allocation2 + $0x3]]
    %s70 = sld [smem:[#allocation2 + $0xd]]
    %s71 = sld [smem:[#allocation2 + $0x17]]
    %v72 = vstv %s69
    %v73 = vmul.f32 %v72, %v35
    %v74 = vstv %s70
    %v75 = vadd.f32 %v73, %v74
    %v76 = vtanh.pop %v75
    %v77 = vstv %s71
    %v78 = vmul.f32 %v77, %v76
    %v79 = vadd.f32 %v68, %v78
    %s80 = sld [smem:[#allocation2 + $0x4]]
    %s81 = sld [smem:[#allocation2 + $0xe]]
    %s82 = sld [smem:[#allocation2 + $0x18]]
    %v83 = vstv %s80
    %v84 = vmul.f32 %v83, %v35
    %v85 = vstv %s81
    %v86 = vadd.f32 %v84, %v85
    %v87 = vtanh.pop %v86
    %v88 = vstv %s82
    %v89 = vmul.f32 %v88, %v87
    %v90 = vadd.f32 %v79, %v89
    %s91 = sld [smem:[#allocation2 + $0x5]]
    %s92 = sld [smem:[#allocation2 + $0xf]]
    %s93 = sld [smem:[#allocation2 + $0x19]]
    %v94 = vstv %s91
    %v95 = vmul.f32 %v94, %v35
    %v96 = vstv %s92
    %v97 = vadd.f32 %v95, %v96
    %v98 = vtanh.pop %v97
    %v99 = vstv %s93
    %v100 = vmul.f32 %v99, %v98
    %v101 = vadd.f32 %v90, %v100
    %s102 = sld [smem:[#allocation2 + $0x6]]
    %s103 = sld [smem:[#allocation2 + $0x10]]
    %s104 = sld [smem:[#allocation2 + $0x1a]]
    %v105 = vstv %s102
    %v106 = vmul.f32 %v105, %v35
    %v107 = vstv %s103
    %v108 = vadd.f32 %v106, %v107
    %v109 = vtanh.pop %v108
    %v110 = vstv %s104
    %v111 = vmul.f32 %v110, %v109
    %v112 = vadd.f32 %v101, %v111
    %s113 = sld [smem:[#allocation2 + $0x7]]
    %s114 = sld [smem:[#allocation2 + $0x11]]
    %s115 = sld [smem:[#allocation2 + $0x1b]]
    %v116 = vstv %s113
    %v117 = vmul.f32 %v116, %v35
    %v118 = vstv %s114
    %v119 = vadd.f32 %v117, %v118
    %v120 = vtanh.pop %v119
    %v121 = vstv %s115
    %v122 = vmul.f32 %v121, %v120
    %v123 = vadd.f32 %v112, %v122
    %s124 = sld [smem:[#allocation2 + $0x8]]
    %s125 = sld [smem:[#allocation2 + $0x12]]
    %s126 = sld [smem:[#allocation2 + $0x1c]]
    %v127 = vstv %s124
    %v128 = vmul.f32 %v127, %v35
    %v129 = vstv %s125
    %v130 = vadd.f32 %v128, %v129
    %v131 = vtanh.pop %v130
    %v132 = vstv %s126
    %v133 = vmul.f32 %v132, %v131
    %v134 = vadd.f32 %v123, %v133
    %s135 = sld [smem:[#allocation2 + $0x9]]
    %s136 = sld [smem:[#allocation2 + $0x13]]
    %s137 = sld [smem:[#allocation2 + $0x1d]]
    %v138 = vstv %s135
    %v139 = vmul.f32 %v138, %v35
    %v140 = vstv %s136
    %v141 = vadd.f32 %v139, %v140
    %v142 = vtanh.pop %v141
    %v143 = vstv %s137
    %v144 = vmul.f32 %v143, %v142
    %v145 = vadd.f32 %v134, %v144
    %s146 = sld [smem:[#allocation2 + $0x1e]]
    %v147 = vstv %s146
    %v148 = vadd.f32 %v145, %v147
    %149 = vst [vmem:[#allocation7] sm:$0xff] %v148
    // Predicated region
    $region18: #{tpu_custom_call.1} parent=1 // pred_check
      _
    $region19: #{tpu_custom_call.1} parent=1 // pred_check_branch
      %151 = sbr.rel (0) target = $region21
    $region20: #{tpu_custom_call.1} parent=1 // pred_region
      %s153 = ssub.s32 128, 128
      %154 = vsyncadd [#allocation4], %s153
      %s156 = sshll.u32 [#allocation7], 4
      %s157 = int_to_ptr.vmem [resolvable:$true] %s156
      %159 = dma.vmem_to_hbm [thread:$0]  %s157, 128, %s2, [#allocation4]
    $region21: #{tpu_custom_call.1} parent=1 // pred_fallthru
      _
    // Predicated region
    $region22: #{tpu_custom_call.1} parent=1 // pred_check
      _
    $region23: #{tpu_custom_call.1} parent=1 // pred_check_branch
      %161 = sbr.rel (0) target = $region25
    $region24: #{tpu_custom_call.1} parent=1 // pred_region
      %162 = dma.done [#allocation4], 128
    $region25: #{tpu_custom_call.1} parent=1 // pred_fallthru
      _
    %163 = vsyncpa [#allocation3], 1
    %164 = vsyncpa [#allocation4], 1
    %165 = vsyncpa [#allocation5], 1

</llo_original>
